<compile_context>
chip_gen: v7x
topology: tpu7x:2x2x1
jax: 0.10.0
libtpu: 0.0.40
codegen_flags: <defaults>
</compile_context>

<pallas_src>
import jax
import jax.numpy as jnp
from jax.experimental import pallas as pl
from jax.experimental.pallas import tpu as pltpu


def generator_kernel(x_ref, w1_ref, b1_ref, w2_ref, b2_ref, out_ref):
    # x_ref:  (TB, 64)  f32      w1_ref: (64, 256)  bf16   b1_ref: (1, 256)  f32
    # w2_ref: (256, 896) bf16    b2_ref: (1, 896)   f32    out_ref: (TB, 896) f32
    x = x_ref[...].astype(jnp.bfloat16)

    # Linear 1: bf16 x bf16 on the MXU, f32 accumulation.
    h = jnp.dot(x, w1_ref[...], preferred_element_type=jnp.float32) + b1_ref[...]

    # LeakyReLU(negative_slope=0.4)  (slope < 1 => max form is exact).
    h = jnp.maximum(h, 0.4 * h)

    # Linear 2 (lane-padded N=896), f32 accumulation.
    y = jnp.dot(h.astype(jnp.bfloat16), w2_ref[...],
                preferred_element_type=jnp.float32) + b2_ref[...]

    # Sigmoid on the EUP; store f32 (cast here if a bf16 output is acceptable
    # downstream to halve the writeback stream).
    out_ref[...] = jax.nn.sigmoid(y).astype(out_ref.dtype)


def generator_forward(x, w1, b1, w2, b2, *, block_b=256):
    """x: (B, z) f32; w1: (z, H) bf16; b1: (1, H) f32; w2: (H, O) bf16; b2: (1, O) f32."""
    B, z_dim = x.shape
    hidden = w1.shape[1]
    out_dim = w2.shape[1]

    # --- Lane-pad the output feature dim to a multiple of 128 (784 -> 896). ---
    out_pad = 128 * pl.cdiv(out_dim, 128)
    if out_pad != out_dim:
        w2p = jnp.pad(w2, ((0, 0), (0, out_pad - out_dim)))
        b2p = jnp.pad(b2, ((0, 0), (0, out_pad - out_dim)))
    else:
        w2p, b2p = w2, b2

    # --- Batch tile: multiple of 8 sublanes; <= block_b (fills the MXU when
    #     the batch is large, stays small for tiny batches).  Sized so
    #     double-buffered x/out tiles + resident weights fit v7x's 64 MiB VMEM.
    tb = min(block_b, 8 * pl.cdiv(B, 8))
    b_padded = tb * pl.cdiv(B, tb)
    xp = jnp.pad(x, ((0, b_padded - B), (0, 0))) if b_padded != B else x

    grid = (b_padded // tb,)

    out = pl.pallas_call(
        generator_kernel,
        out_shape=jax.ShapeDtypeStruct((b_padded, out_pad), jnp.float32),
        grid_spec=pl.GridSpec(
            grid=grid,
            in_specs=[
                # Activations: tiled over batch (double-buffered by Pallas).
                pl.BlockSpec((tb, z_dim), lambda i: (i, 0)),
                # Weights / biases: constant block index -> DMA'd once,
                # resident in VMEM for the whole grid.
                pl.BlockSpec((z_dim, hidden), lambda i: (0, 0)),
                pl.BlockSpec((1, hidden), lambda i: (0, 0)),
                pl.BlockSpec((hidden, out_pad), lambda i: (0, 0)),
                pl.BlockSpec((1, out_pad), lambda i: (0, 0)),
            ],
            out_specs=pl.BlockSpec((tb, out_pad), lambda i: (i, 0)),
        ),
        compiler_params=pltpu.CompilerParams(
            # Batch tiles are independent -> shard across TensorCores on v7x.
            dimension_semantics=("parallel",),
        ),
    )(xp, w1, b1, w2p, b2p)

    # Slice off batch + lane padding outside the kernel.
    return out[:B, :out_dim]


def init_params(key, z_dim=64, hidden=256, out_dim=784):
    # PyTorch nn.Linear default init: U(-1/sqrt(fan_in), 1/sqrt(fan_in));
    # weights stored [in, out]; weights cast to bf16 for HBM-bandwidth savings.
    k1, k2, k3, k4 = jax.random.split(key, 4)
    bound1 = 1.0 / jnp.sqrt(z_dim)
    bound2 = 1.0 / jnp.sqrt(hidden)
    w1 = jax.random.uniform(k1, (z_dim, hidden), jnp.float32, -bound1, bound1)
    b1 = jax.random.uniform(k2, (1, hidden), jnp.float32, -bound1, bound1)
    w2 = jax.random.uniform(k3, (hidden, out_dim), jnp.float32, -bound2, bound2)
    b2 = jax.random.uniform(k4, (1, out_dim), jnp.float32, -bound2, bound2)
    return w1.astype(jnp.bfloat16), b1, w2.astype(jnp.bfloat16), b2


if __name__ == "__main__":
    z_dim = 64
    batch = 8

    key = jax.random.PRNGKey(0)
    k_x, k_p = jax.random.split(key)

    x = jax.random.normal(k_x, (batch, z_dim), dtype=jnp.float32)
    w1, b1, w2, b2 = init_params(k_p, z_dim=z_dim)

    out = generator_forward(x, w1, b1, w2, b2)
    out = jax.block_until_ready(out)

    # Plain-JAX reference mirroring the kernel's bf16 compute path.
    xb = x.astype(jnp.bfloat16)
    h_ref = jnp.dot(xb, w1, preferred_element_type=jnp.float32) + b1
    h_ref = jnp.maximum(h_ref, 0.4 * h_ref)
    y_ref = jnp.dot(h_ref.astype(jnp.bfloat16), w2,
                    preferred_element_type=jnp.float32) + b2
    ref = jax.nn.sigmoid(y_ref)

    assert out.shape == (batch, 784)
    assert jnp.allclose(out, ref, atol=1e-2, rtol=0), float(
        jnp.max(jnp.abs(out - ref)))

    print("KERNEL_OK")
</pallas_src>

<mosaic_0001>
module attributes {stable_mosaic.version = 11 : i64} {
  func.func @generator_kernel(%arg0: i32, %arg1: memref<8x64xf32, #tpu.memory_space<vmem>>, %arg2: memref<64x256xbf16, #tpu.memory_space<vmem>>, %arg3: memref<1x256xf32, #tpu.memory_space<vmem>>, %arg4: memref<256x896xbf16, #tpu.memory_space<vmem>>, %arg5: memref<1x896xf32, #tpu.memory_space<vmem>>, %arg6: memref<8x896xf32, #tpu.memory_space<vmem>>) attributes {dimension_semantics = [#tpu.dimension_semantics<parallel>], iteration_bounds = array<i64: 1>, scalar_prefetch = 0 : i64, scratch_operands = 0 : i64, tpu.core_type = #tpu.core_type<tc>, window_params = [{transform_indices = @transform_0, window_bounds = array<i64: 8, 64>}, {pipeline_mode = #tpu.pipeline_mode<synchronous>, transform_indices = @transform_1, window_bounds = array<i64: 64, 256>}, {pipeline_mode = #tpu.pipeline_mode<synchronous>, transform_indices = @transform_2, window_bounds = array<i64: 1, 256>}, {pipeline_mode = #tpu.pipeline_mode<synchronous>, transform_indices = @transform_3, window_bounds = array<i64: 256, 896>}, {pipeline_mode = #tpu.pipeline_mode<synchronous>, transform_indices = @transform_4, window_bounds = array<i64: 1, 896>}, {transform_indices = @transform_5, window_bounds = array<i64: 8, 896>}]} {
    %c0 = arith.constant 0 : index
    %c0_0 = arith.constant 0 : index
    %0 = vector.load %arg1[%c0, %c0_0] : memref<8x64xf32, #tpu.memory_space<vmem>>, vector<8x64xf32>
    %1 = arith.truncf %0 : vector<8x64xf32> to vector<8x64xbf16>
    %c0_1 = arith.constant 0 : index
    %c0_2 = arith.constant 0 : index
    %2 = vector.load %arg2[%c0_1, %c0_2] : memref<64x256xbf16, #tpu.memory_space<vmem>>, vector<64x256xbf16>
    %cst = arith.constant dense<0.000000e+00> : vector<8x256xf32>
    %3 = tpu.matmul %1, %2, %cst {dimension_numbers = #tpu.dot_dimension_numbers<[1], [0], [0], [1], [0, 0, 1, 1], [], []>} : vector<8x64xbf16>, vector<64x256xbf16>, vector<8x256xf32> -> vector<8x256xf32>
    %c0_3 = arith.constant 0 : index
    %c0_4 = arith.constant 0 : index
    %4 = vector.load %arg3[%c0_3, %c0_4] : memref<1x256xf32, #tpu.memory_space<vmem>>, vector<1x256xf32>
    %5 = vector.broadcast %4 : vector<1x256xf32> to vector<8x256xf32>
    %6 = arith.addf %3, %5 : vector<8x256xf32>
    %cst_5 = arith.constant 4.000000e-01 : f32
    %7 = vector.broadcast %cst_5 : f32 to vector<8x256xf32>
    %8 = arith.mulf %7, %6 : vector<8x256xf32>
    %9 = arith.maximumf %6, %8 : vector<8x256xf32>
    %10 = arith.truncf %9 : vector<8x256xf32> to vector<8x256xbf16>
    %c0_6 = arith.constant 0 : index
    %c0_7 = arith.constant 0 : index
    %11 = vector.load %arg4[%c0_6, %c0_7] : memref<256x896xbf16, #tpu.memory_space<vmem>>, vector<256x896xbf16>
    %cst_8 = arith.constant dense<0.000000e+00> : vector<8x896xf32>
    %12 = tpu.matmul %10, %11, %cst_8 {dimension_numbers = #tpu.dot_dimension_numbers<[1], [0], [0], [1], [0, 0, 1, 1], [], []>} : vector<8x256xbf16>, vector<256x896xbf16>, vector<8x896xf32> -> vector<8x896xf32>
    %c0_9 = arith.constant 0 : index
    %c0_10 = arith.constant 0 : index
    %13 = vector.load %arg5[%c0_9, %c0_10] : memref<1x896xf32, #tpu.memory_space<vmem>>, vector<1x896xf32>
    %14 = vector.broadcast %13 : vector<1x896xf32> to vector<8x896xf32>
    %15 = arith.addf %12, %14 : vector<8x896xf32>
    %16 = arith.negf %15 : vector<8x896xf32>
    %17 = math.exp %16 : vector<8x896xf32>
    %cst_11 = arith.constant 1.000000e+00 : f32
    %18 = vector.broadcast %cst_11 : f32 to vector<8x896xf32>
    %19 = arith.addf %18, %17 : vector<8x896xf32>
    %20 = arith.divf %18, %19 : vector<8x896xf32>
    %c0_12 = arith.constant 0 : index
    %c0_13 = arith.constant 0 : index
    %21 = vector.load %arg6[%c0_12, %c0_13] : memref<8x896xf32, #tpu.memory_space<vmem>>, vector<8x896xf32>
    tpu.vector_store %arg6[%c0_12, %c0_13], %20 {strides = array<i32>} : memref<8x896xf32, #tpu.memory_space<vmem>>, vector<8x896xf32>,
    return
  }
  func.func @transform_0(%arg0: i32) -> (i32, i32) {
    %c0_i32 = arith.constant 0 : i32
    %c0_i32_0 = arith.constant 0 : i32
    return %arg0, %c0_i32 : i32, i32
  }
  func.func @transform_1(%arg0: i32) -> (i32, i32) {
    %c0_i32 = arith.constant 0 : i32
    %c0_i32_0 = arith.constant 0 : i32
    %c0_i32_1 = arith.constant 0 : i32
    return %c0_i32, %c0_i32_0 : i32, i32
  }
  func.func @transform_2(%arg0: i32) -> (i32, i32) {
    %c0_i32 = arith.constant 0 : i32
    %c0_i32_0 = arith.constant 0 : i32
    %c0_i32_1 = arith.constant 0 : i32
    return %c0_i32, %c0_i32_0 : i32, i32
  }
  func.func @transform_3(%arg0: i32) -> (i32, i32) {
    %c0_i32 = arith.constant 0 : i32
    %c0_i32_0 = arith.constant 0 : i32
    %c0_i32_1 = arith.constant 0 : i32
    return %c0_i32, %c0_i32_0 : i32, i32
  }
  func.func @transform_4(%arg0: i32) -> (i32, i32) {
    %c0_i32 = arith.constant 0 : i32
    %c0_i32_0 = arith.constant 0 : i32
    %c0_i32_1 = arith.constant 0 : i32
    return %c0_i32, %c0_i32_0 : i32, i32
  }
  func.func @transform_5(%arg0: i32) -> (i32, i32) {
    %c0_i32 = arith.constant 0 : i32
    %c0_i32_0 = arith.constant 0 : i32
    return %arg0, %c0_i32 : i32, i32
  }
}

</mosaic_0001>

<llo_original>
// kernel: tpu_custom_call.1
$region0: #{tpu_custom_call.1}
  #allocation0 [shape = 'u32[]', space=smem, size = 0x4, offset = 0x4, fixed_abs, tag = 'smem constant byte address 0x4 - core index']
  #allocation1 [shape = 'u32[144,128]{1,0:T(1,128)}', space=vmem, size = 0x12000, scoped, tag = 'internal scratch']
  %s0 = inlined_call_operand.hbm [shape: f32[8,64], index: 0, kind: input, shape index: {}]
  %s1 = inlined_call_operand.hbm [shape: bf16[64,256], index: 1, kind: input, shape index: {}]
  %s2 = inlined_call_operand.vmem [shape: f32[1,256], index: 2, kind: input, shape index: {}]
  %s3 = inlined_call_operand.hbm [shape: bf16[256,896], index: 3, kind: input, shape index: {}]
  %s4 = inlined_call_operand.vmem [shape: f32[1,896], index: 4, kind: input, shape index: {}]
  %s5 = inlined_call_operand.hbm [shape: f32[8,896], index: 5, kind: output, shape index: {}]
  %s6 = sld [smem:[#allocation0]]
  $region42: #{tpu_custom_call.1} parent=0
    _
  %s8 = ssub.s32 1, %s6
  %s9 = scalar_select 0, %s8, %s6
  $region1: #{tpu_custom_call.1} parent=0
    #allocation2 [shape = 'u8[4096]{0}', space=vmem, size = 0x1000, scoped, tag = 'input window, operand 0, single buffered']
    #allocation3 [shape = 's32[1]{0}', space=sflag, size = 0x4, scoped, tag = 'scoped memory for tpu_custom_call.1']
    #allocation4 [shape = 's32[1]{0}', space=sflag, size = 0x4, scoped, tag = 'scoped memory for tpu_custom_call.1']
    #allocation5 [shape = 'u8[32768]{0}', space=vmem, size = 0x8000, scoped, tag = 'input window, operand 1, single buffered']
    #allocation6 [shape = 's32[1]{0}', space=sflag, size = 0x4, scoped, tag = 'scoped memory for tpu_custom_call.1']
    #allocation7 [shape = 'u8[458752]{0}', space=vmem, size = 0x70000, scoped, tag = 'input window, operand 3, single buffered']
    #allocation8 [shape = 'u8[28672]{0}', space=vmem, size = 0x7000, scoped, tag = 'output window, operand 0, single buffered']
    %10 = vsyncpa [#allocation3], 0
    %11 = vsyncpa [#allocation6], 0
    %12 = vsyncpa [#allocation4], 0
    // Predicated region
    $region2: #{tpu_custom_call.1} parent=1 // pred_check
      _
    $region3: #{tpu_custom_call.1} parent=1 // pred_check_branch
      %14 = sbr.rel (0) target = $region5
    $region4: #{tpu_custom_call.1} parent=1 // pred_region
      %s16 = ssub.s32 128, 128
      %17 = vsyncadd [#allocation3], %s16
      %s19 = sshll.u32 [#allocation2], 4
      %s20 = int_to_ptr.vmem [resolvable:$true] %s19
      %22 = dma.hbm_to_vmem [thread:$0]  %s0, 128, %s20, [#allocation3]
    $region5: #{tpu_custom_call.1} parent=1 // pred_fallthru
      _
    // Predicated region
    $region6: #{tpu_custom_call.1} parent=1 // pred_check
      _
    $region7: #{tpu_custom_call.1} parent=1 // pred_check_branch
      %24 = sbr.rel (0) target = $region9
    $region8: #{tpu_custom_call.1} parent=1 // pred_region
      %s26 = ssub.s32 1024, 1024
      %27 = vsyncadd [#allocation6], %s26
      %s28 = sshll.u32 [#allocation5], 4
      %s29 = int_to_ptr.vmem [resolvable:$true] %s28
      %34 = dma.hbm_to_vmem [thread:$0]  %s1, 1024, %s29, [#allocation6], 128, 128, 8
    $region9: #{tpu_custom_call.1} parent=1 // pred_fallthru
      _
    // Predicated region
    $region10: #{tpu_custom_call.1} parent=1 // pred_check
      _
    $region11: #{tpu_custom_call.1} parent=1 // pred_check_branch
      %36 = sbr.rel (0) target = $region13
    $region12: #{tpu_custom_call.1} parent=1 // pred_region
      _
    $region13: #{tpu_custom_call.1} parent=1 // pred_fallthru
      _
    // Predicated region
    $region14: #{tpu_custom_call.1} parent=1 // pred_check
      _
    $region15: #{tpu_custom_call.1} parent=1 // pred_check_branch
      %38 = sbr.rel (0) target = $region17
    $region16: #{tpu_custom_call.1} parent=1 // pred_region
      %s40 = ssub.s32 14336, 14336
      %41 = vsyncadd [#allocation6], %s40
      %s42 = sshll.u32 [#allocation7], 4
      %s43 = int_to_ptr.vmem [resolvable:$true] %s42
      %48 = dma.hbm_to_vmem [thread:$0]  %s3, 14336, %s43, [#allocation6], 448, 448, 28
    $region17: #{tpu_custom_call.1} parent=1 // pred_fallthru
      _
    // Predicated region
    $region18: #{tpu_custom_call.1} parent=1 // pred_check
      _
    $region19: #{tpu_custom_call.1} parent=1 // pred_check_branch
      %50 = sbr.rel (0) target = $region21
    $region20: #{tpu_custom_call.1} parent=1 // pred_region
      _
    $region21: #{tpu_custom_call.1} parent=1 // pred_fallthru
      _
    // Predicated region
    $region22: #{tpu_custom_call.1} parent=1 // pred_check
      _
    $region23: #{tpu_custom_call.1} parent=1 // pred_check_branch
      %52 = sbr.rel (0) target = $region25
    $region24: #{tpu_custom_call.1} parent=1 // pred_region
      %53 = dma.done [#allocation3], 128
    $region25: #{tpu_custom_call.1} parent=1 // pred_fallthru
      _
    // Predicated region
    $region26: #{tpu_custom_call.1} parent=1 // pred_check
      _
    $region27: #{tpu_custom_call.1} parent=1 // pred_check_branch
      %55 = sbr.rel (0) target = $region29
    $region28: #{tpu_custom_call.1} parent=1 // pred_region
      %56 = dma.done [#allocation6], 1024
    $region29: #{tpu_custom_call.1} parent=1 // pred_fallthru
      _
    // Predicated region
    $region30: #{tpu_custom_call.1} parent=1 // pred_check
      _
    $region31: #{tpu_custom_call.1} parent=1 // pred_check_branch
      %58 = sbr.rel (0) target = $region33
    $region32: #{tpu_custom_call.1} parent=1 // pred_region
      %59 = dma.done [#allocation6], 14336
    $region33: #{tpu_custom_call.1} parent=1 // pred_fallthru
      _
    %v61 = vld [vmem:[#allocation2] sm:$0xff]
    %v62 = vpack.c.bf16 %v61, %v61
    %v63 = vld [vmem:[#allocation5] sm:$0xff]
    %v64 = vld [vmem:[#allocation5 + $0x8] sm:$0xff]
    %v65 = vld [vmem:[#allocation5 + $0x10] sm:$0xff]
    %v66 = vld [vmem:[#allocation5 + $0x18] sm:$0xff]
    %v67 = vld [vmem:[#allocation5 + $0x20] sm:$0xff]
    %v68 = vld [vmem:[#allocation5 + $0x28] sm:$0xff]
    %v69 = vld [vmem:[#allocation5 + $0x30] sm:$0xff]
    %v70 = vld [vmem:[#allocation5 + $0x38] sm:$0xff]
    %v71 = vld [vmem:[%s2] sm:$0x3]
    %v73 = vlaneseq
    %v74 = vshrl.u32 %v73, 7
    %v75 = vsub.s32 0, %v74
    %v76 = vrot.slane %v71, %v75
    %v77 = vlaneseq
    %v78 = vshrl.u32 %v77, 7
    %v79 = vsub.s32 1, %v78
    %v80 = vrot.slane %v71, %v79
    %v91 = vunpack.c.l.b16 %v63
    %v92 = vunpack.c.h.b16 %v63
    %v93 = vunpack.c.l.b16 %v64
    %v94 = vunpack.c.h.b16 %v64
    %v95 = vunpack.c.l.b16 %v65
    %v96 = vunpack.c.h.b16 %v65
    %v97 = vunpack.c.l.b16 %v66
    %v98 = vunpack.c.h.b16 %v66
    %v99 = vunpack.c.l.b16 %v67
    %v100 = vunpack.c.h.b16 %v67
    %v101 = vunpack.c.l.b16 %v68
    %v102 = vunpack.c.h.b16 %v68
    %v103 = vunpack.c.l.b16 %v69
    %v104 = vunpack.c.h.b16 %v69
    %v105 = vunpack.c.l.b16 %v70
    %v106 = vunpack.c.h.b16 %v70
    %v107 = vpack.c.b16 %v93, %v91
    %v108 = vpack.c.b16 %v94, %v92
    %v109 = vpack.c.b16 %v97, %v95
    %v110 = vpack.c.b16 %v98, %v96
    %v111 = vpack.c.b16 %v101, %v99
    %v112 = vpack.c.b16 %v102, %v100
    %v113 = vpack.c.b16 %v105, %v103
    %v114 = vpack.c.b16 %v106, %v104
    %vm123 = vcmask 523264
    %v125 = vsel %vm123, %v62, 0
    %127 = vmatprep.subr.bf16.mxu0 %v108
    %128 = vmatpush1.bf16.msra.mxu0 %v107
    %129 = vmatprep.subr.bf16.mxu0 %v110
    %130 = vmatpush1.bf16.msra.mxu0 %v109
    %131 = vmatprep.subr.bf16.mxu0 %v112
    %132 = vmatpush1.bf16.msra.mxu0 %v111
    %133 = vmatprep.subr.bf16.mxu0 %v114
    %134 = vmatpush1.bf16.msra.mxu0 %v113
    %135 = vmatprep.subr.bf16.mxu0 0
    %136 = vmatpush1.bf16.msra.mxu0 0
    %137 = vmatprep.subr.bf16.mxu0 0
    %138 = vmatpush1.bf16.msra.mxu0 0
    %139 = vmatprep.subr.bf16.mxu0 0
    %140 = vmatpush1.bf16.msra.mxu0 0
    %141 = vmatprep.subr.bf16.mxu0 0
    %142 = vmatpush1.bf16.msra.mxu0 0
    %143 = vmatprep.subr.bf16.mxu0 0
    %144 = vmatpush1.bf16.msra.mxu0 0
    %145 = vmatprep.subr.bf16.mxu0 0
    %146 = vmatpush1.bf16.msra.mxu0 0
    %147 = vmatprep.subr.bf16.mxu0 0
    %148 = vmatpush1.bf16.msra.mxu0 0
    %149 = vmatprep.subr.bf16.mxu0 0
    %150 = vmatpush1.bf16.msra.mxu0 0
    %151 = vmatprep.subr.bf16.mxu0 0
    %152 = vmatpush1.bf16.msra.mxu0 0
    %153 = vmatprep.subr.bf16.mxu0 0
    %154 = vmatpush1.bf16.msra.mxu0 0
    %155 = vmatprep.subr.bf16.mxu0 0
    %156 = vmatpush1.bf16.msra.mxu0 0
    %157 = vmatprep.subr.bf16.mxu0 0
    %158 = vmatpush1.bf16.msra.mxu0 0
    %159 = vmatprep.mubr.bf16.mxu0 0
    %160 = vmatmul.mubr.bf16.gmra.mrb[0].mxu0 %v125
    %v161 = vpop.f32.mrb[0].mxu0
    %v162 = vadd.f32 %v76, %v161
    %v163 = vpop.f32.mrb[0].mxu0
    %v164 = vadd.f32 %v80, %v163
    %v165 = vpop.f32.mrb[0].mxu0
    %v166 = vpop.f32.mrb[0].mxu0
    %167 = vdwg.mxu0
    %v168 = vmul.f32 %v162, 0.4
    %v169 = vmul.f32 %v164, 0.4
    %v170 = vmax.f32 %v162, %v168
    %v171 = vmax.f32 %v164, %v169
    %v172 = vpack.c.bf16 %v170, %v170
    %v173 = vpack.c.bf16 %v171, %v171
    %v174 = vld [vmem:[#allocation7] sm:$0xff]
    %v175 = vld [vmem:[#allocation7 + $0x8] sm:$0xff]
    %v176 = vld [vmem:[#allocation7 + $0x10] sm:$0xff]
    %v177 = vld [vmem:[#allocation7 + $0x18] sm:$0xf]
    %v178 = vld [vmem:[#allocation7 + $0x1c] sm:$0xff]
    %v179 = vld [vmem:[#allocation7 + $0x24] sm:$0xff]
    %v180 = vld [vmem:[#allocation7 + $0x2c] sm:$0xff]
    %v181 = vld [vmem:[#allocation7 + $0x34] sm:$0xf]
    %v182 = vld [vmem:[#allocation7 + $0x38] sm:$0xff]
    %v183 = vld [vmem:[#allocation7 + $0x40] sm:$0xff]
    %v184 = vld [vmem:[#allocation7 + $0x48] sm:$0xff]
    %v185 = vld [vmem:[#allocation7 + $0x50] sm:$0xf]
    %v186 = vld [vmem:[#allocation7 + $0x54] sm:$0xff]
    %v187 = vld [vmem:[#allocation7 + $0x5c] sm:$0xff]
    %v188 = vld [vmem:[#allocation7 + $0x64] sm:$0xff]
    %v189 = vld [vmem:[#allocation7 + $0x6c] sm:$0xf]
    %v190 = vld [vmem:[#allocation7 + $0x70] sm:$0xff]
    %v191 = vld [vmem:[#allocation7 + $0x78] sm:$0xff]
    %v192 = vld [vmem:[#allocation7 + $0x80] sm:$0xff]
    %v193 = vld [vmem:[#allocation7 + $0x88] sm:$0xf]
    %v194 = vld [vmem:[#allocation7 + $0x8c] sm:$0xff]
    %v195 = vld [vmem:[#allocation7 + $0x94] sm:$0xff]
    %v196 = vld [vmem:[#allocation7 + $0x9c] sm:$0xff]
    %v197 = vld [vmem:[#allocation7 + $0xa4] sm:$0xf]
    %v198 = vld [vmem:[#allocation7 + $0xa8] sm:$0xff]
    %v199 = vld [vmem:[#allocation7 + $0xb0] sm:$0xff]
    %v200 = vld [vmem:[#allocation7 + $0xb8] sm:$0xff]
    %v201 = vld [vmem:[#allocation7 + $0xc0] sm:$0xf]
    %v202 = vld [vmem:[#allocation7 + $0xc4] sm:$0xff]
    %v203 = vld [vmem:[#allocation7 + $0xcc] sm:$0xff]
    %v204 = vld [vmem:[#allocation7 + $0xd4] sm:$0xff]
    %v205 = vld [vmem:[#allocation7 + $0xdc] sm:$0xf]
    %v206 = vld [vmem:[#allocation7 + $0xe0] sm:$0xff]
    %v207 = vld [vmem:[#allocation7 + $0xe8] sm:$0xff]
    %v208 = vld [vmem:[#allocation7 + $0xf0] sm:$0xff]
    %v209 = vld [vmem:[#allocation7 + $0xf8] sm:$0xf]
    %v210 = vld [vmem:[#allocation7 + $0xfc] sm:$0xff]
    %v211 = vld [vmem:[#allocation7 + $0x104] sm:$0xff]
    %v212 = vld [vmem:[#allocation7 + $0x10c] sm:$0xff]
    %v213 = vld [vmem:[#allocation7 + $0x114] sm:$0xf]
    %v214 = vld [vmem:[#allocation7 + $0x118] sm:$0xff]
    %v215 = vld [vmem:[#allocation7 + $0x120] sm:$0xff]
    %v216 = vld [vmem:[#allocation7 + $0x128] sm:$0xff]
    %v217 = vld [vmem:[#allocation7 + $0x130] sm:$0xf]
    %v218 = vld [vmem:[#allocation7 + $0x134] sm:$0xff]
    %v219 = vld [vmem:[#allocation7 + $0x13c] sm:$0xff]
    %v220 = vld [vmem:[#allocation7 + $0x144] sm:$0xff]
    %v221 = vld [vmem:[#allocation7 + $0x14c] sm:$0xf]
    %v222 = vld [vmem:[#allocation7 + $0x150] sm:$0xff]
    %v223 = vld [vmem:[#allocation7 + $0x158] sm:$0xff]
    %v224 = vld [vmem:[#allocation7 + $0x160] sm:$0xff]
    %v225 = vld [vmem:[#allocation7 + $0x168] sm:$0xf]
    %v226 = vld [vmem:[#allocation7 + $0x16c] sm:$0xff]
    %v227 = vld [vmem:[#allocation7 + $0x174] sm:$0xff]
    %v228 = vld [vmem:[#allocation7 + $0x17c] sm:$0xff]
    %v229 = vld [vmem:[#allocation7 + $0x184] sm:$0xf]
    %v230 = vld [vmem:[#allocation7 + $0x188] sm:$0xff]
    %v231 = vld [vmem:[#allocation7 + $0x190] sm:$0xff]
    %v232 = vld [vmem:[#allocation7 + $0x198] sm:$0xff]
    %v233 = vld [vmem:[#allocation7 + $0x1a0] sm:$0xf]
    %v234 = vld [vmem:[#allocation7 + $0x1a4] sm:$0xff]
    %v235 = vld [vmem:[#allocation7 + $0x1ac] sm:$0xff]
    %v236 = vld [vmem:[#allocation7 + $0x1b4] sm:$0xff]
    %v237 = vld [vmem:[#allocation7 + $0x1bc] sm:$0xf]
    %v238 = vld [vmem:[#allocation7 + $0x1c0] sm:$0xff]
    %v239 = vld [vmem:[#allocation7 + $0x1c8] sm:$0xff]
    %v240 = vld [vmem:[#allocation7 + $0x1d0] sm:$0xff]
    %v241 = vld [vmem:[#allocation7 + $0x1d8] sm:$0xf]
    %v242 = vld [vmem:[#allocation7 + $0x1dc] sm:$0xff]
    %v243 = vld [vmem:[#allocation7 + $0x1e4] sm:$0xff]
    %v244 = vld [vmem:[#allocation7 + $0x1ec] sm:$0xff]
    %v245 = vld [vmem:[#allocation7 + $0x1f4] sm:$0xf]
    %v246 = vld [vmem:[#allocation7 + $0x1f8] sm:$0xff]
    %v247 = vld [vmem:[#allocation7 + $0x200] sm:$0xff]
    %v248 = vld [vmem:[#allocation7 + $0x208] sm:$0xff]
    %v249 = vld [vmem:[#allocation7 + $0x210] sm:$0xf]
    %v250 = vld [vmem:[#allocation7 + $0x214] sm:$0xff]
    %v251 = vld [vmem:[#allocation7 + $0x21c] sm:$0xff]
    %v252 = vld [vmem:[#allocation7 + $0x224] sm:$0xff]
    %v253 = vld [vmem:[#allocation7 + $0x22c] sm:$0xf]
    %v254 = vld [vmem:[#allocation7 + $0x230] sm:$0xff]
    %v255 = vld [vmem:[#allocation7 + $0x238] sm:$0xff]
    %v256 = vld [vmem:[#allocation7 + $0x240] sm:$0xff]
    %v257 = vld [vmem:[#allocation7 + $0x248] sm:$0xf]
    %v258 = vld [vmem:[#allocation7 + $0x24c] sm:$0xff]
    %v259 = vld [vmem:[#allocation7 + $0x254] sm:$0xff]
    %v260 = vld [vmem:[#allocation7 + $0x25c] sm:$0xff]
    %v261 = vld [vmem:[#allocation7 + $0x264] sm:$0xf]
    %v262 = vld [vmem:[#allocation7 + $0x268] sm:$0xff]
    %v263 = vld [vmem:[#allocation7 + $0x270] sm:$0xff]
    %v264 = vld [vmem:[#allocation7 + $0x278] sm:$0xff]
    %v265 = vld [vmem:[#allocation7 + $0x280] sm:$0xf]
    %v266 = vld [vmem:[#allocation7 + $0x284] sm:$0xff]
    %v267 = vld [vmem:[#allocation7 + $0x28c] sm:$0xff]
    %v268 = vld [vmem:[#allocation7 + $0x294] sm:$0xff]
    %v269 = vld [vmem:[#allocation7 + $0x29c] sm:$0xf]
    %v270 = vld [vmem:[#allocation7 + $0x2a0] sm:$0xff]
    %v271 = vld [vmem:[#allocation7 + $0x2a8] sm:$0xff]
    %v272 = vld [vmem:[#allocation7 + $0x2b0] sm:$0xff]
    %v273 = vld [vmem:[#allocation7 + $0x2b8] sm:$0xf]
    %v274 = vld [vmem:[#allocation7 + $0x2bc] sm:$0xff]
    %v275 = vld [vmem:[#allocation7 + $0x2c4] sm:$0xff]
    %v276 = vld [vmem:[#allocation7 + $0x2cc] sm:$0xff]
    %v277 = vld [vmem:[#allocation7 + $0x2d4] sm:$0xf]
    %v278 = vld [vmem:[#allocation7 + $0x2d8] sm:$0xff]
    %v279 = vld [vmem:[#allocation7 + $0x2e0] sm:$0xff]
    %v280 = vld [vmem:[#allocation7 + $0x2e8] sm:$0xff]
    %v281 = vld [vmem:[#allocation7 + $0x2f0] sm:$0xf]
    %v282 = vld [vmem:[#allocation7 + $0x2f4] sm:$0xff]
    %v283 = vld [vmem:[#allocation7 + $0x2fc] sm:$0xff]
    %v284 = vld [vmem:[#allocation7 + $0x304] sm:$0xff]
    %v285 = vld [vmem:[#allocation7 + $0x30c] sm:$0xf]
    %v286 = vld [vmem:[#allocation7 + $0x310] sm:$0xff]
    %v287 = vld [vmem:[#allocation7 + $0x318] sm:$0xff]
    %v288 = vld [vmem:[#allocation7 + $0x320] sm:$0xff]
    %v289 = vld [vmem:[#allocation7 + $0x328] sm:$0xf]
    %v290 = vld [vmem:[#allocation7 + $0x32c] sm:$0xff]
    %v291 = vld [vmem:[#allocation7 + $0x334] sm:$0xff]
    %v292 = vld [vmem:[#allocation7 + $0x33c] sm:$0xff]
    %v293 = vld [vmem:[#allocation7 + $0x344] sm:$0xf]
    %v294 = vld [vmem:[#allocation7 + $0x348] sm:$0xff]
    %v295 = vld [vmem:[#allocation7 + $0x350] sm:$0xff]
    %v296 = vld [vmem:[#allocation7 + $0x358] sm:$0xff]
    %v297 = vld [vmem:[#allocation7 + $0x360] sm:$0xf]
    %v298 = vld [vmem:[#allocation7 + $0x364] sm:$0xff]
    %v299 = vld [vmem:[#allocation7 + $0x36c] sm:$0xff]
    %v300 = vld [vmem:[#allocation7 + $0x374] sm:$0xff]
    %v301 = vld [vmem:[#allocation7 + $0x37c] sm:$0xf]
    %v302 = vld [vmem:[%s4] sm:$0xff]
    %v304 = vlaneseq
    %v305 = vshrl.u32 %v304, 7
    %v306 = vsub.s32 0, %v305
    %v307 = vrot.slane %v302, %v306
    %v308 = vlaneseq
    %v309 = vshrl.u32 %v308, 7
    %v310 = vsub.s32 1, %v309
    %v311 = vrot.slane %v302, %v310
    %v312 = vlaneseq
    %v313 = vshrl.u32 %v312, 7
    %v314 = vsub.s32 2, %v313
    %v315 = vrot.slane %v302, %v314
    %v316 = vlaneseq
    %v317 = vshrl.u32 %v316, 7
    %v318 = vsub.s32 3, %v317
    %v319 = vrot.slane %v302, %v318
    %v320 = vlaneseq
    %v321 = vshrl.u32 %v320, 7
    %v322 = vsub.s32 4, %v321
    %v323 = vrot.slane %v302, %v322
    %v324 = vlaneseq
    %v325 = vshrl.u32 %v324, 7
    %v326 = vsub.s32 5, %v325
    %v327 = vrot.slane %v302, %v326
    %v328 = vlaneseq
    %v329 = vshrl.u32 %v328, 7
    %v330 = vsub.s32 6, %v329
    %v331 = vrot.slane %v302, %v330
    %v467 = vunpack.c.l.b16 %v174
    %v468 = vunpack.c.h.b16 %v174
    %v469 = vunpack.c.l.b16 %v175
    %v470 = vunpack.c.h.b16 %v175
    %v471 = vunpack.c.l.b16 %v176
    %v472 = vunpack.c.h.b16 %v176
    %v473 = vunpack.c.l.b16 %v177
    %v474 = vunpack.c.l.b16 %v178
    %v475 = vunpack.c.h.b16 %v178
    %v476 = vunpack.c.l.b16 %v179
    %v477 = vunpack.c.h.b16 %v179
    %v478 = vunpack.c.l.b16 %v180
    %v479 = vunpack.c.h.b16 %v180
    %v480 = vunpack.c.l.b16 %v181
    %v481 = vunpack.c.l.b16 %v182
    %v482 = vunpack.c.h.b16 %v182
    %v483 = vunpack.c.l.b16 %v183
    %v484 = vunpack.c.h.b16 %v183
    %v485 = vunpack.c.l.b16 %v184
    %v486 = vunpack.c.h.b16 %v184
    %v487 = vunpack.c.l.b16 %v185
    %v488 = vunpack.c.l.b16 %v186
    %v489 = vunpack.c.h.b16 %v186
    %v490 = vunpack.c.l.b16 %v187
    %v491 = vunpack.c.h.b16 %v187
    %v492 = vunpack.c.l.b16 %v188
    %v493 = vunpack.c.h.b16 %v188
    %v494 = vunpack.c.l.b16 %v189
    %v495 = vunpack.c.l.b16 %v190
    %v496 = vunpack.c.h.b16 %v190
    %v497 = vunpack.c.l.b16 %v191
    %v498 = vunpack.c.h.b16 %v191
    %v499 = vunpack.c.l.b16 %v192
    %v500 = vunpack.c.h.b16 %v192
    %v501 = vunpack.c.l.b16 %v193
    %v502 = vunpack.c.l.b16 %v194
    %v503 = vunpack.c.h.b16 %v194
    %v504 = vunpack.c.l.b16 %v195
    %v505 = vunpack.c.h.b16 %v195
    %v506 = vunpack.c.l.b16 %v196
    %v507 = vunpack.c.h.b16 %v196
    %v508 = vunpack.c.l.b16 %v197
    %v509 = vunpack.c.l.b16 %v198
    %v510 = vunpack.c.h.b16 %v198
    %v511 = vunpack.c.l.b16 %v199
    %v512 = vunpack.c.h.b16 %v199
    %v513 = vunpack.c.l.b16 %v200
    %v514 = vunpack.c.h.b16 %v200
    %v515 = vunpack.c.l.b16 %v201
    %v516 = vunpack.c.l.b16 %v202
    %v517 = vunpack.c.h.b16 %v202
    %v518 = vunpack.c.l.b16 %v203
    %v519 = vunpack.c.h.b16 %v203
    %v520 = vunpack.c.l.b16 %v204
    %v521 = vunpack.c.h.b16 %v204
    %v522 = vunpack.c.l.b16 %v205
    %v523 = vunpack.c.l.b16 %v206
    %v524 = vunpack.c.h.b16 %v206
    %v525 = vunpack.c.l.b16 %v207
    %v526 = vunpack.c.h.b16 %v207
    %v527 = vunpack.c.l.b16 %v208
    %v528 = vunpack.c.h.b16 %v208
    %v529 = vunpack.c.l.b16 %v209
    %v530 = vunpack.c.l.b16 %v210
    %v531 = vunpack.c.h.b16 %v210
    %v532 = vunpack.c.l.b16 %v211
    %v533 = vunpack.c.h.b16 %v211
    %v534 = vunpack.c.l.b16 %v212
    %v535 = vunpack.c.h.b16 %v212
    %v536 = vunpack.c.l.b16 %v213
    %v537 = vunpack.c.l.b16 %v214
    %v538 = vunpack.c.h.b16 %v214
    %v539 = vunpack.c.l.b16 %v215
    %v540 = vunpack.c.h.b16 %v215
    %v541 = vunpack.c.l.b16 %v216
    %v542 = vunpack.c.h.b16 %v216
    %v543 = vunpack.c.l.b16 %v217
    %v544 = vunpack.c.l.b16 %v218
    %v545 = vunpack.c.h.b16 %v218
    %v546 = vunpack.c.l.b16 %v219
    %v547 = vunpack.c.h.b16 %v219
    %v548 = vunpack.c.l.b16 %v220
    %v549 = vunpack.c.h.b16 %v220
    %v550 = vunpack.c.l.b16 %v221
    %v551 = vunpack.c.l.b16 %v222
    %v552 = vunpack.c.h.b16 %v222
    %v553 = vunpack.c.l.b16 %v223
    %v554 = vunpack.c.h.b16 %v223
    %v555 = vunpack.c.l.b16 %v224
    %v556 = vunpack.c.h.b16 %v224
    %v557 = vunpack.c.l.b16 %v225
    %v558 = vunpack.c.l.b16 %v226
    %v559 = vunpack.c.h.b16 %v226
    %v560 = vunpack.c.l.b16 %v227
    %v561 = vunpack.c.h.b16 %v227
    %v562 = vunpack.c.l.b16 %v228
    %v563 = vunpack.c.h.b16 %v228
    %v564 = vunpack.c.l.b16 %v229
    %v565 = vunpack.c.l.b16 %v230
    %v566 = vunpack.c.h.b16 %v230
    %v567 = vunpack.c.l.b16 %v231
    %v568 = vunpack.c.h.b16 %v231
    %v569 = vunpack.c.l.b16 %v232
    %v570 = vunpack.c.h.b16 %v232
    %v571 = vunpack.c.l.b16 %v233
    %v572 = vunpack.c.l.b16 %v234
    %v573 = vunpack.c.h.b16 %v234
    %v574 = vunpack.c.l.b16 %v235
    %v575 = vunpack.c.h.b16 %v235
    %v576 = vunpack.c.l.b16 %v236
    %v577 = vunpack.c.h.b16 %v236
    %v578 = vunpack.c.l.b16 %v237
    %v579 = vunpack.c.l.b16 %v238
    %v580 = vunpack.c.h.b16 %v238
    %v581 = vunpack.c.l.b16 %v239
    %v582 = vunpack.c.h.b16 %v239
    %v583 = vunpack.c.l.b16 %v240
    %v584 = vunpack.c.h.b16 %v240
    %v585 = vunpack.c.l.b16 %v241
    %v586 = vunpack.c.l.b16 %v242
    %v587 = vunpack.c.h.b16 %v242
    %v588 = vunpack.c.l.b16 %v243
    %v589 = vunpack.c.h.b16 %v243
    %v590 = vunpack.c.l.b16 %v244
    %v591 = vunpack.c.h.b16 %v244
    %v592 = vunpack.c.l.b16 %v245
    %v593 = vunpack.c.l.b16 %v246
    %v594 = vunpack.c.h.b16 %v246
    %v595 = vunpack.c.l.b16 %v247
    %v596 = vunpack.c.h.b16 %v247
    %v597 = vunpack.c.l.b16 %v248
    %v598 = vunpack.c.h.b16 %v248
    %v599 = vunpack.c.l.b16 %v249
    %v600 = vunpack.c.l.b16 %v250
    %v601 = vunpack.c.h.b16 %v250
    %v602 = vunpack.c.l.b16 %v251
    %v603 = vunpack.c.h.b16 %v251
    %v604 = vunpack.c.l.b16 %v252
    %v605 = vunpack.c.h.b16 %v252
    %v606 = vunpack.c.l.b16 %v253
    %v607 = vunpack.c.l.b16 %v254
    %v608 = vunpack.c.h.b16 %v254
    %v609 = vunpack.c.l.b16 %v255
    %v610 = vunpack.c.h.b16 %v255
    %v611 = vunpack.c.l.b16 %v256
    %v612 = vunpack.c.h.b16 %v256
    %v613 = vunpack.c.l.b16 %v257
    %v614 = vunpack.c.l.b16 %v258
    %v615 = vunpack.c.h.b16 %v258
    %v616 = vunpack.c.l.b16 %v259
    %v617 = vunpack.c.h.b16 %v259
    %v618 = vunpack.c.l.b16 %v260
    %v619 = vunpack.c.h.b16 %v260
    %v620 = vunpack.c.l.b16 %v261
    %v621 = vunpack.c.l.b16 %v262
    %v622 = vunpack.c.h.b16 %v262
    %v623 = vunpack.c.l.b16 %v263
    %v624 = vunpack.c.h.b16 %v263
    %v625 = vunpack.c.l.b16 %v264
    %v626 = vunpack.c.h.b16 %v264
    %v627 = vunpack.c.l.b16 %v265
    %v628 = vunpack.c.l.b16 %v266
    %v629 = vunpack.c.h.b16 %v266
    %v630 = vunpack.c.l.b16 %v267
    %v631 = vunpack.c.h.b16 %v267
    %v632 = vunpack.c.l.b16 %v268
    %v633 = vunpack.c.h.b16 %v268
    %v634 = vunpack.c.l.b16 %v269
    %v635 = vunpack.c.l.b16 %v270
    %v636 = vunpack.c.h.b16 %v270
    %v637 = vunpack.c.l.b16 %v271
    %v638 = vunpack.c.h.b16 %v271
    %v639 = vunpack.c.l.b16 %v272
    %v640 = vunpack.c.h.b16 %v272
    %v641 = vunpack.c.l.b16 %v273
    %v642 = vunpack.c.l.b16 %v274
    %v643 = vunpack.c.h.b16 %v274
    %v644 = vunpack.c.l.b16 %v275
    %v645 = vunpack.c.h.b16 %v275
    %v646 = vunpack.c.l.b16 %v276
    %v647 = vunpack.c.h.b16 %v276
    %v648 = vunpack.c.l.b16 %v277
    %v649 = vunpack.c.l.b16 %v278
    %v650 = vunpack.c.h.b16 %v278
    %v651 = vunpack.c.l.b16 %v279
    %v652 = vunpack.c.h.b16 %v279
    %v653 = vunpack.c.l.b16 %v280
    %v654 = vunpack.c.h.b16 %v280
    %v655 = vunpack.c.l.b16 %v281
    %v656 = vunpack.c.l.b16 %v282
    %v657 = vunpack.c.h.b16 %v282
    %v658 = vunpack.c.l.b16 %v283
    %v659 = vunpack.c.h.b16 %v283
    %v660 = vunpack.c.l.b16 %v284
    %v661 = vunpack.c.h.b16 %v284
    %v662 = vunpack.c.l.b16 %v285
    %v663 = vunpack.c.l.b16 %v286
    %v664 = vunpack.c.h.b16 %v286
    %v665 = vunpack.c.l.b16 %v287
    %v666 = vunpack.c.h.b16 %v287
    %v667 = vunpack.c.l.b16 %v288
    %v668 = vunpack.c.h.b16 %v288
    %v669 = vunpack.c.l.b16 %v289
    %v670 = vunpack.c.l.b16 %v290
    %v671 = vunpack.c.h.b16 %v290
    %v672 = vunpack.c.l.b16 %v291
    %v673 = vunpack.c.h.b16 %v291
    %v674 = vunpack.c.l.b16 %v292
    %v675 = vunpack.c.h.b16 %v292
    %v676 = vunpack.c.l.b16 %v293
    %v677 = vunpack.c.l.b16 %v294
    %v678 = vunpack.c.h.b16 %v294
    %v679 = vunpack.c.l.b16 %v295
    %v680 = vunpack.c.h.b16 %v295
    %v681 = vunpack.c.l.b16 %v296
    %v682 = vunpack.c.h.b16 %v296
    %v683 = vunpack.c.l.b16 %v297
    %v684 = vunpack.c.l.b16 %v298
    %v685 = vunpack.c.h.b16 %v298
    %v686 = vunpack.c.l.b16 %v299
    %v687 = vunpack.c.h.b16 %v299
    %v688 = vunpack.c.l.b16 %v300
    %v689 = vunpack.c.h.b16 %v300
    %v690 = vunpack.c.l.b16 %v301
    %v691 = vpack.c.b16 %v474, %v467
    %v692 = vpack.c.b16 %v475, %v468
    %v693 = vpack.c.b16 %v476, %v469
    %v694 = vpack.c.b16 %v477, %v470
    %v695 = vpack.c.b16 %v478, %v471
    %v696 = vpack.c.b16 %v479, %v472
    %v697 = vpack.c.b16 %v480, %v473
    %v698 = vpack.c.b16 %v488, %v481
    %v699 = vpack.c.b16 %v489, %v482
    %v700 = vpack.c.b16 %v490, %v483
    %v701 = vpack.c.b16 %v491, %v484
    %v702 = vpack.c.b16 %v492, %v485
    %v703 = vpack.c.b16 %v493, %v486
    %v704 = vpack.c.b16 %v494, %v487
    %v705 = vpack.c.b16 %v502, %v495
    %v706 = vpack.c.b16 %v503, %v496
    %v707 = vpack.c.b16 %v504, %v497
    %v708 = vpack.c.b16 %v505, %v498
    %v709 = vpack.c.b16 %v506, %v499
    %v710 = vpack.c.b16 %v507, %v500
    %v711 = vpack.c.b16 %v508, %v501
    %v712 = vpack.c.b16 %v516, %v509
    %v713 = vpack.c.b16 %v517, %v510
    %v714 = vpack.c.b16 %v518, %v511
    %v715 = vpack.c.b16 %v519, %v512
    %v716 = vpack.c.b16 %v520, %v513
    %v717 = vpack.c.b16 %v521, %v514
    %v718 = vpack.c.b16 %v522, %v515
    %v719 = vpack.c.b16 %v530, %v523
    %v720 = vpack.c.b16 %v531, %v524
    %v721 = vpack.c.b16 %v532, %v525
    %v722 = vpack.c.b16 %v533, %v526
    %v723 = vpack.c.b16 %v534, %v527
    %v724 = vpack.c.b16 %v535, %v528
    %v725 = vpack.c.b16 %v536, %v529
    %v726 = vpack.c.b16 %v544, %v537
    %v727 = vpack.c.b16 %v545, %v538
    %v728 = vpack.c.b16 %v546, %v539
    %v729 = vpack.c.b16 %v547, %v540
    %v730 = vpack.c.b16 %v548, %v541
    %v731 = vpack.c.b16 %v549, %v542
    %v732 = vpack.c.b16 %v550, %v543
    %v733 = vpack.c.b16 %v558, %v551
    %v734 = vpack.c.b16 %v559, %v552
    %v735 = vpack.c.b16 %v560, %v553
    %v736 = vpack.c.b16 %v561, %v554
    %v737 = vpack.c.b16 %v562, %v555
    %v738 = vpack.c.b16 %v563, %v556
    %v739 = vpack.c.b16 %v564, %v557
    %v740 = vpack.c.b16 %v572, %v565
    %v741 = vpack.c.b16 %v573, %v566
    %v742 = vpack.c.b16 %v574, %v567
    %v743 = vpack.c.b16 %v575, %v568
    %v744 = vpack.c.b16 %v576, %v569
    %v745 = vpack.c.b16 %v577, %v570
    %v746 = vpack.c.b16 %v578, %v571
    %v747 = vpack.c.b16 %v586, %v579
    %v748 = vpack.c.b16 %v587, %v580
    %v749 = vpack.c.b16 %v588, %v581
    %v750 = vpack.c.b16 %v589, %v582
    %v751 = vpack.c.b16 %v590, %v583
    %v752 = vpack.c.b16 %v591, %v584
    %v753 = vpack.c.b16 %v592, %v585
    %v754 = vpack.c.b16 %v600, %v593
    %v755 = vpack.c.b16 %v601, %v594
    %v756 = vpack.c.b16 %v602, %v595
    %v757 = vpack.c.b16 %v603, %v596
    %v758 = vpack.c.b16 %v604, %v597
    %v759 = vpack.c.b16 %v605, %v598
    %v760 = vpack.c.b16 %v606, %v599
    %v761 = vpack.c.b16 %v614, %v607
    %v762 = vpack.c.b16 %v615, %v608
    %v763 = vpack.c.b16 %v616, %v609
    %v764 = vpack.c.b16 %v617, %v610
    %v765 = vpack.c.b16 %v618, %v611
    %v766 = vpack.c.b16 %v619, %v612
    %v767 = vpack.c.b16 %v620, %v613
    %v768 = vpack.c.b16 %v628, %v621
    %v769 = vpack.c.b16 %v629, %v622
    %v770 = vpack.c.b16 %v630, %v623
    %v771 = vpack.c.b16 %v631, %v624
    %v772 = vpack.c.b16 %v632, %v625
    %v773 = vpack.c.b16 %v633, %v626
    %v774 = vpack.c.b16 %v634, %v627
    %v775 = vpack.c.b16 %v642, %v635
    %v776 = vpack.c.b16 %v643, %v636
    %v777 = vpack.c.b16 %v644, %v637
    %v778 = vpack.c.b16 %v645, %v638
    %v779 = vpack.c.b16 %v646, %v639
    %v780 = vpack.c.b16 %v647, %v640
    %v781 = vpack.c.b16 %v648, %v641
    %v782 = vpack.c.b16 %v656, %v649
    %v783 = vpack.c.b16 %v657, %v650
    %v784 = vpack.c.b16 %v658, %v651
    %v785 = vpack.c.b16 %v659, %v652
    %v786 = vpack.c.b16 %v660, %v653
    %v787 = vpack.c.b16 %v661, %v654
    %v788 = vpack.c.b16 %v662, %v655
    %v789 = vpack.c.b16 %v670, %v663
    %v790 = vpack.c.b16 %v671, %v664
    %v791 = vpack.c.b16 %v672, %v665
    %v792 = vpack.c.b16 %v673, %v666
    %v793 = vpack.c.b16 %v674, %v667
    %v794 = vpack.c.b16 %v675, %v668
    %v795 = vpack.c.b16 %v676, %v669
    %v796 = vpack.c.b16 %v684, %v677
    %v797 = vpack.c.b16 %v685, %v678
    %v798 = vpack.c.b16 %v686, %v679
    %v799 = vpack.c.b16 %v687, %v680
    %v800 = vpack.c.b16 %v688, %v681
    %v801 = vpack.c.b16 %v689, %v682
    %v802 = vpack.c.b16 %v690, %v683
    %915 = vmatprep.subr.bf16.mxu0 %v692
    %916 = vmatpush1.bf16.msra.mxu0 %v691
    %917 = vmatprep.subr.bf16.mxu0 %v699
    %918 = vmatpush1.bf16.msra.mxu0 %v698
    %919 = vmatprep.subr.bf16.mxu0 %v706
    %920 = vmatpush1.bf16.msra.mxu0 %v705
    %921 = vmatprep.subr.bf16.mxu0 %v713
    %922 = vmatpush1.bf16.msra.mxu0 %v712
    %923 = vmatprep.subr.bf16.mxu0 %v720
    %924 = vmatpush1.bf16.msra.mxu0 %v719
    %925 = vmatprep.subr.bf16.mxu0 %v727
    %926 = vmatpush1.bf16.msra.mxu0 %v726
    %927 = vmatprep.subr.bf16.mxu0 %v734
    %928 = vmatpush1.bf16.msra.mxu0 %v733
    %929 = vmatprep.subr.bf16.mxu0 %v741
    %930 = vmatpush1.bf16.msra.mxu0 %v740
    %931 = vmatprep.subr.bf16.mxu0 %v748
    %932 = vmatpush1.bf16.msra.mxu0 %v747
    %933 = vmatprep.subr.bf16.mxu0 %v755
    %934 = vmatpush1.bf16.msra.mxu0 %v754
    %935 = vmatprep.subr.bf16.mxu0 %v762
    %936 = vmatpush1.bf16.msra.mxu0 %v761
    %937 = vmatprep.subr.bf16.mxu0 %v769
    %938 = vmatpush1.bf16.msra.mxu0 %v768
    %939 = vmatprep.subr.bf16.mxu0 %v776
    %940 = vmatpush1.bf16.msra.mxu0 %v775
    %941 = vmatprep.subr.bf16.mxu0 %v783
    %942 = vmatpush1.bf16.msra.mxu0 %v782
    %943 = vmatprep.subr.bf16.mxu0 %v790
    %944 = vmatpush1.bf16.msra.mxu0 %v789
    %945 = vmatprep.subr.bf16.mxu0 %v797
    %946 = vmatpush1.bf16.msra.mxu0 %v796
    %947 = vmatprep.mubr.bf16.mxu0 %v173
    %948 = vmatmul.mubr.bf16.gmra.mrb[0].mxu0 %v172
    %v949 = vpop.f32.mrb[0].mxu0
    %v950 = vadd.f32 %v307, %v949
    %v951 = vpop.f32.mrb[0].mxu0
    %v952 = vadd.f32 %v311, %v951
    %v953 = vpop.f32.mrb[0].mxu0
    %v954 = vpop.f32.mrb[0].mxu0
    %955 = vdwg.mxu0
    %956 = vmatprep.subr.bf16.mxu0 %v694
    %957 = vmatpush1.bf16.msra.mxu0 %v693
    %958 = vmatprep.subr.bf16.mxu0 %v701
    %959 = vmatpush1.bf16.msra.mxu0 %v700
    %960 = vmatprep.subr.bf16.mxu0 %v708
    %961 = vmatpush1.bf16.msra.mxu0 %v707
    %962 = vmatprep.subr.bf16.mxu0 %v715
    %963 = vmatpush1.bf16.msra.mxu0 %v714
    %964 = vmatprep.subr.bf16.mxu0 %v722
    %965 = vmatpush1.bf16.msra.mxu0 %v721
    %966 = vmatprep.subr.bf16.mxu0 %v729
    %967 = vmatpush1.bf16.msra.mxu0 %v728
    %968 = vmatprep.subr.bf16.mxu0 %v736
    %969 = vmatpush1.bf16.msra.mxu0 %v735
    %970 = vmatprep.subr.bf16.mxu0 %v743
    %971 = vmatpush1.bf16.msra.mxu0 %v742
    %972 = vmatprep.subr.bf16.mxu0 %v750
    %973 = vmatpush1.bf16.msra.mxu0 %v749
    %974 = vmatprep.subr.bf16.mxu0 %v757
    %975 = vmatpush1.bf16.msra.mxu0 %v756
    %976 = vmatprep.subr.bf16.mxu0 %v764
    %977 = vmatpush1.bf16.msra.mxu0 %v763
    %978 = vmatprep.subr.bf16.mxu0 %v771
    %979 = vmatpush1.bf16.msra.mxu0 %v770
    %980 = vmatprep.subr.bf16.mxu0 %v778
    %981 = vmatpush1.bf16.msra.mxu0 %v777
    %982 = vmatprep.subr.bf16.mxu0 %v785
    %983 = vmatpush1.bf16.msra.mxu0 %v784
    %984 = vmatprep.subr.bf16.mxu0 %v792
    %985 = vmatpush1.bf16.msra.mxu0 %v791
    %986 = vmatprep.subr.bf16.mxu0 %v799
    %987 = vmatpush1.bf16.msra.mxu0 %v798
    %988 = vmatprep.mubr.bf16.mxu0 %v173
    %989 = vmatmul.mubr.bf16.gmra.mrb[0].mxu0 %v172
    %v990 = vpop.f32.mrb[0].mxu0
    %v991 = vadd.f32 %v315, %v990
    %v992 = vpop.f32.mrb[0].mxu0
    %v993 = vadd.f32 %v319, %v992
    %v994 = vpop.f32.mrb[0].mxu0
    %v995 = vpop.f32.mrb[0].mxu0
    %996 = vdwg.mxu0
    %997 = vmatprep.subr.bf16.mxu0 %v696
    %998 = vmatpush1.bf16.msra.mxu0 %v695
    %999 = vmatprep.subr.bf16.mxu0 %v703
    %1000 = vmatpush1.bf16.msra.mxu0 %v702
    %1001 = vmatprep.subr.bf16.mxu0 %v710
    %1002 = vmatpush1.bf16.msra.mxu0 %v709
    %1003 = vmatprep.subr.bf16.mxu0 %v717
    %1004 = vmatpush1.bf16.msra.mxu0 %v716
    %1005 = vmatprep.subr.bf16.mxu0 %v724
    %1006 = vmatpush1.bf16.msra.mxu0 %v723
    %1007 = vmatprep.subr.bf16.mxu0 %v731
    %1008 = vmatpush1.bf16.msra.mxu0 %v730
    %1009 = vmatprep.subr.bf16.mxu0 %v738
    %1010 = vmatpush1.bf16.msra.mxu0 %v737
    %1011 = vmatprep.subr.bf16.mxu0 %v745
    %1012 = vmatpush1.bf16.msra.mxu0 %v744
    %1013 = vmatprep.subr.bf16.mxu0 %v752
    %1014 = vmatpush1.bf16.msra.mxu0 %v751
    %1015 = vmatprep.subr.bf16.mxu0 %v759
    %1016 = vmatpush1.bf16.msra.mxu0 %v758
    %1017 = vmatprep.subr.bf16.mxu0 %v766
    %1018 = vmatpush1.bf16.msra.mxu0 %v765
    %1019 = vmatprep.subr.bf16.mxu0 %v773
    %1020 = vmatpush1.bf16.msra.mxu0 %v772
    %1021 = vmatprep.subr.bf16.mxu0 %v780
    %1022 = vmatpush1.bf16.msra.mxu0 %v779
    %1023 = vmatprep.subr.bf16.mxu0 %v787
    %1024 = vmatpush1.bf16.msra.mxu0 %v786
    %1025 = vmatprep.subr.bf16.mxu0 %v794
    %1026 = vmatpush1.bf16.msra.mxu0 %v793
    %1027 = vmatprep.subr.bf16.mxu0 %v801
    %1028 = vmatpush1.bf16.msra.mxu0 %v800
    %1029 = vmatprep.mubr.bf16.mxu0 %v173
    %1030 = vmatmul.mubr.bf16.gmra.mrb[0].mxu0 %v172
    %v1031 = vpop.f32.mrb[0].mxu0
    %v1032 = vadd.f32 %v323, %v1031
    %v1033 = vpop.f32.mrb[0].mxu0
    %v1034 = vadd.f32 %v327, %v1033
    %v1035 = vpop.f32.mrb[0].mxu0
    %v1036 = vpop.f32.mrb[0].mxu0
    %1037 = vdwg.mxu0
    %1038 = vmatprep.subr.bf16.mxu0 0
    %1039 = vmatpush1.bf16.msra.mxu0 %v697
    %1040 = vmatprep.subr.bf16.mxu0 0
    %1041 = vmatpush1.bf16.msra.mxu0 %v704
    %1042 = vmatprep.subr.bf16.mxu0 0
    %1043 = vmatpush1.bf16.msra.mxu0 %v711
    %1044 = vmatprep.subr.bf16.mxu0 0
    %1045 = vmatpush1.bf16.msra.mxu0 %v718
    %1046 = vmatprep.subr.bf16.mxu0 0
    %1047 = vmatpush1.bf16.msra.mxu0 %v725
    %1048 = vmatprep.subr.bf16.mxu0 0
    %1049 = vmatpush1.bf16.msra.mxu0 %v732
    %1050 = vmatprep.subr.bf16.mxu0 0
    %1051 = vmatpush1.bf16.msra.mxu0 %v739
    %1052 = vmatprep.subr.bf16.mxu0 0
    %1053 = vmatpush1.bf16.msra.mxu0 %v746
    %1054 = vmatprep.subr.bf16.mxu0 0
    %1055 = vmatpush1.bf16.msra.mxu0 %v753
    %1056 = vmatprep.subr.bf16.mxu0 0
    %1057 = vmatpush1.bf16.msra.mxu0 %v760
    %1058 = vmatprep.subr.bf16.mxu0 0
    %1059 = vmatpush1.bf16.msra.mxu0 %v767
    %1060 = vmatprep.subr.bf16.mxu0 0
    %1061 = vmatpush1.bf16.msra.mxu0 %v774
    %1062 = vmatprep.subr.bf16.mxu0 0
    %1063 = vmatpush1.bf16.msra.mxu0 %v781
    %1064 = vmatprep.subr.bf16.mxu0 0
    %1065 = vmatpush1.bf16.msra.mxu0 %v788
    %1066 = vmatprep.subr.bf16.mxu0 0
    %1067 = vmatpush1.bf16.msra.mxu0 %v795
    %1068 = vmatprep.subr.bf16.mxu0 0
    %1069 = vmatpush1.bf16.msra.mxu0 %v802
    %1070 = vmatprep.mubr.bf16.mxu0 %v173
    %1071 = vmatmul.mubr.bf16.gmra.mrb[0].mxu0 %v172
    %v1072 = vpop.f32.mrb[0].mxu0
    %v1073 = vadd.f32 %v331, %v1072
    %v1074 = vpop.f32.mrb[0].mxu0
    %v1075 = vpop.f32.mrb[0].mxu0
    %v1076 = vpop.f32.mrb[0].mxu0
    %1077 = vdwg.mxu0
    %v1078 = vxor.u32 %v950, 2147483648
    %v1079 = vxor.u32 %v952, 2147483648
    %v1080 = vxor.u32 %v991, 2147483648
    %v1081 = vxor.u32 %v993, 2147483648
    %v1082 = vxor.u32 %v1032, 2147483648
    %v1083 = vxor.u32 %v1034, 2147483648
    %v1084 = vxor.u32 %v1073, 2147483648
    %v1085 = vmul.f32 %v1078, 1.442695
    %v1086 = vpow.pop %v1085
    %v1087 = vmul.f32 %v1079, 1.442695
    %v1088 = vpow.pop %v1087
    %v1089 = vmul.f32 %v1080, 1.442695
    %v1090 = vpow.pop %v1089
    %v1091 = vmul.f32 %v1081, 1.442695
    %v1092 = vpow.pop %v1091
    %v1093 = vmul.f32 %v1082, 1.442695
    %v1094 = vpow.pop %v1093
    %v1095 = vmul.f32 %v1083, 1.442695
    %v1096 = vpow.pop %v1095
    %v1097 = vmul.f32 %v1084, 1.442695
    %v1098 = vpow.pop %v1097
    %v1099 = vadd.f32 %v1086, 1.0
    %v1100 = vadd.f32 %v1088, 1.0
    %v1101 = vadd.f32 %v1090, 1.0
    %v1102 = vadd.f32 %v1092, 1.0
    %v1103 = vadd.f32 %v1094, 1.0
    %v1104 = vadd.f32 %v1096, 1.0
    %v1105 = vadd.f32 %v1098, 1.0
    %v1106 = vrcp.pop %v1099
    %v1107 = vmul.f32 1.0, %v1106
    %v1108 = vrcp.pop %v1100
    %v1109 = vmul.f32 1.0, %v1108
    %v1110 = vrcp.pop %v1101
    %v1111 = vmul.f32 1.0, %v1110
    %v1112 = vrcp.pop %v1102
    %v1113 = vmul.f32 1.0, %v1112
    %v1114 = vrcp.pop %v1103
    %v1115 = vmul.f32 1.0, %v1114
    %v1116 = vrcp.pop %v1104
    %v1117 = vmul.f32 1.0, %v1116
    %v1118 = vrcp.pop %v1105
    %v1119 = vmul.f32 1.0, %v1118
    %1120 = vst [vmem:[#allocation8] sm:$0xff] %v1107
    %1121 = vst [vmem:[#allocation8 + $0x8] sm:$0xff] %v1109
    %1122 = vst [vmem:[#allocation8 + $0x10] sm:$0xff] %v1111
    %1123 = vst [vmem:[#allocation8 + $0x18] sm:$0xff] %v1113
    %1124 = vst [vmem:[#allocation8 + $0x20] sm:$0xff] %v1115
    %1125 = vst [vmem:[#allocation8 + $0x28] sm:$0xff] %v1117
    %1126 = vst [vmem:[#allocation8 + $0x30] sm:$0xff] %v1119
    // Predicated region
    $region34: #{tpu_custom_call.1} parent=1 // pred_check
      _
    $region35: #{tpu_custom_call.1} parent=1 // pred_check_branch
      %1128 = sbr.rel (0) target = $region37
    $region36: #{tpu_custom_call.1} parent=1 // pred_region
      %s1130 = ssub.s32 896, 896
      %1131 = vsyncadd [#allocation4], %s1130
      %s1133 = sshll.u32 [#allocation8], 4
      %s1134 = int_to_ptr.vmem [resolvable:$true] %s1133
      %1136 = dma.vmem_to_hbm [thread:$0]  %s1134, 896, %s5, [#allocation4]
    $region37: #{tpu_custom_call.1} parent=1 // pred_fallthru
      _
    // Predicated region
    $region38: #{tpu_custom_call.1} parent=1 // pred_check
      _
    $region39: #{tpu_custom_call.1} parent=1 // pred_check_branch
      %1138 = sbr.rel (0) target = $region41
    $region40: #{tpu_custom_call.1} parent=1 // pred_region
      %1139 = dma.done [#allocation4], 896
    $region41: #{tpu_custom_call.1} parent=1 // pred_fallthru
      _
    %1140 = vsyncpa [#allocation3], 1
    %1141 = vsyncpa [#allocation6], 1
    %1142 = vsyncpa [#allocation4], 1

</llo_original>
